<compile_context>
chip_gen: v6e
topology: v6e:2x2x1
jax: 0.10.0
libtpu: 0.0.40
codegen_flags: <defaults>
</compile_context>

<pallas_src>
import functools

import jax
import jax.numpy as jnp
from jax.experimental import pallas as pl
from jax.experimental.pallas import tpu as pltpu

LN_EPS = 1e-5
TOPK = 8
NEG = -1e12

_SMEM_SPEC = functools.partial(pl.BlockSpec, memory_space=pltpu.MemorySpace.SMEM)
_ANY_SPEC = functools.partial(pl.BlockSpec, memory_space=pl.ANY)


# ---------------------------------------------------------------------------
# in-kernel helpers
# ---------------------------------------------------------------------------
def _layernorm(x, w, b):
    mu = jnp.mean(x, axis=-1, keepdims=True)
    xc = x - mu
    var = jnp.mean(xc * xc, axis=-1, keepdims=True)
    return xc * jax.lax.rsqrt(var + LN_EPS) * w + b


def _gelu(x):
    # TODO(synk): torch nn.GELU() is the exact erf-GELU; tanh approximation is
    # used because erf lowering in Mosaic is not guaranteed.
    c = 0.7978845608028654  # sqrt(2/pi)
    return 0.5 * x * (1.0 + jnp.tanh(c * (x + 0.044715 * x * x * x)))


def _topk_lastdim(x, k):
    """x: [1, W] -> [1, k] values in descending order (iterative max)."""
    w = x.shape[-1]
    iota = jax.lax.broadcasted_iota(jnp.int32, x.shape, 1)
    work = x
    tops = []
    for _ in range(k):
        m = jnp.max(work, axis=-1, keepdims=True)
        tops.append(m)
        idx = jnp.min(jnp.where(work == m, iota, w), axis=-1, keepdims=True)
        work = jnp.where(iota == idx, -jnp.inf, work)
    return jnp.concatenate(tops, axis=-1)


def _mh_attention_1q(q, keys, values, bias3, head_eh, head_he, head_count):
    """Multi-head attention for a single query token, compact-softmax version.

    q: [B, E] f32; keys/values: [B, S, E] (f32 or bf16); bias3: [B or 1, S, 1].
    head_eh: [E, H] bf16 indicator (e belongs to head h); head_he: [H, E] bf16.
    Scores are reduced to [B, S, H] (one lane per head) so max/exp/sum/divide
    do H lanes of work instead of E; probabilities are expanded back to
    [B, S, E] with one tiny bf16 matmul right before the weighted value sum.
    """
    B, E = q.shape
    H = head_count
    C = E // H
    S = keys.shape[1]
    scale = C ** -0.5

    p = (q * scale)[:, None, :] * keys                              # [B, S, E] f32
    s = jnp.dot(p.reshape(B * S, E).astype(jnp.bfloat16), head_eh,
                preferred_element_type=jnp.float32).reshape(B, S, H)
    s = s + bias3                                                   # [B, S, H]
    m = jnp.max(s, axis=1, keepdims=True)                           # [B, 1, H]
    e = jnp.exp(s - m)
    w = e / jnp.sum(e, axis=1, keepdims=True)                       # [B, S, H]
    w_full = jnp.dot(w.reshape(B * S, H).astype(jnp.bfloat16), head_he,
                     preferred_element_type=jnp.float32).reshape(B, S, E)
    return jnp.sum(w_full * values, axis=1)                         # [B, E]


# ---------------------------------------------------------------------------
# kernels
# ---------------------------------------------------------------------------
def cross_kv_kernel(enc_ref, w_ref, out_ref):
    """Per-layer fused cross-attention K|V projection of encoder_state (bf16 out)."""
    B, T, E = enc_ref.shape
    enc2 = enc_ref[...].reshape(B * T, E).astype(jnp.bfloat16)
    ckv = jnp.dot(enc2, w_ref[...], preferred_element_type=jnp.float32)
    out_ref[...] = ckv.reshape(B, T, 2 * E).astype(jnp.bfloat16)


def decoder_stack_kernel(
        # inputs
        tok_idx_ref,        # SMEM (1,) int32  : current token index
        ds_in_ref,          # VMEM [B, E]      : tok_emb + pos_emb (pre-LN)
        ln_emb_w_ref,       # VMEM [1, E]      : embedding LN scale
        ln_emb_b_ref,       # VMEM [1, E]      : embedding LN bias
        cbias_ref,          # VMEM [B, T, 1]   : cross-attn additive bias
        head_eh_ref,        # VMEM [E, H] bf16 : head indicator (E -> H reduce)
        head_he_ref,        # VMEM [H, E] bf16 : head indicator (H -> E expand)
        ckv_ref,            # VMEM [B, T, 2E] bf16: precomputed cross K|V (layer l)
        w_qkv_ref,          # VMEM [E, 3E] bf16: fused self k|v|q projection
        w_so_ref,           # VMEM [E, E]  bf16: self-attn out projection
        w_cq_ref,           # VMEM [E, E]  bf16: cross-attn q projection
        w_co_ref,           # VMEM [E, E]  bf16: cross-attn out projection
        w_g01_ref,          # VMEM [E, 2G] bf16: fused GLU fc0|fc1
        w_g2_ref,           # VMEM [G, E]  bf16: GLU fc2
        ln_w_e_ref,         # VMEM [5, E]      : LN scales (pre_self,self,pre_enc,enc,glu0)
        ln_b_e_ref,         # VMEM [5, E]      : LN biases
        ln_w_g_ref,         # VMEM [1, G]
        ln_b_g_ref,         # VMEM [1, G]
        as_in_hbm,          # ANY  [L, 2B, S, E] bf16: KV cache (aliased with output)
        # outputs
        ds_out_ref,         # VMEM [B, E]
        as_out_hbm,         # ANY  [L, 2B, S, E] (same HBM buffer as as_in_hbm)
        # scratch
        ds_state,           # VMEM [B, E] f32       : running decoder state
        kv_cache,           # VMEM [2, 2B, S, E] bf16: double-buffered cache slabs
        kv_new,             # VMEM [2B, 1, E] bf16  : new (k, v) column
        sems,               # DMA semaphores (3,): [0..1] slab in, [2] column out
        *, head_count):
    l = pl.program_id(0)
    nl = pl.num_programs(0)
    ti = tok_idx_ref[0]
    B, E = ds_in_ref.shape
    S = kv_cache.shape[2]
    G = w_g2_ref.shape[0]
    slot = l & 1

    @pl.when(l == 0)
    def _prime():
        # first slab copy (only this one is not hidden behind a full layer)
        pltpu.make_async_copy(as_in_hbm.at[0], kv_cache.at[0], sems.at[0]).start()
        # embedding LayerNorm folded into the stack
        ds_state[...] = _layernorm(ds_in_ref[...], ln_emb_w_ref[...],
                                   ln_emb_b_ref[...])

    @pl.when(l + 1 < nl)
    def _prefetch_next_slab():
        nslot = (l + 1) & 1
        pltpu.make_async_copy(as_in_hbm.at[l + 1], kv_cache.at[nslot],
                              sems.at[nslot]).start()

    head_eh = head_eh_ref[...]
    head_he = head_he_ref[...]
    ln_w_e = ln_w_e_ref[...]
    ln_b_e = ln_b_e_ref[...]
    ds = ds_state[...]

    # ---------------- self attention ----------------
    residual = ds
    x = _layernorm(ds, ln_w_e[0:1], ln_b_e[0:1])
    qkv = jnp.dot(x.astype(jnp.bfloat16), w_qkv_ref[...],
                  preferred_element_type=jnp.float32)              # [B, 3E]
    k = qkv[:, 0:E]
    v = qkv[:, E:2 * E]
    q = qkv[:, 2 * E:3 * E]

    # only the new (key, value) column of the cache goes back to HBM (in place)
    kv_new[...] = jnp.concatenate([k, v], axis=0)[:, None, :].astype(jnp.bfloat16)

    # wait for this layer's cache slab (started one layer earlier), then it is
    # safe to overwrite the token_index column of this slab in HBM
    pltpu.make_async_copy(as_in_hbm.at[l], kv_cache.at[slot], sems.at[slot]).wait()
    cp_out = pltpu.make_async_copy(
        kv_new, as_out_hbm.at[l, :, pl.ds(ti, 1), :], sems.at[2])
    cp_out.start()

    cache = kv_cache[slot]                                         # [2B, S, E] bf16
    pos = jax.lax.broadcasted_iota(jnp.int32, (1, S, 1), 1)
    is_new = pos == ti
    keys = jnp.where(is_new, k[:, None, :], cache[0:B].astype(jnp.float32))
    values = jnp.where(is_new, v[:, None, :], cache[B:2 * B].astype(jnp.float32))
    self_bias = jnp.where(pos <= ti, 0.0, NEG).astype(jnp.float32)
    attn = _mh_attention_1q(q, keys, values, self_bias, head_eh, head_he,
                            head_count)
    x = jnp.dot(attn.astype(jnp.bfloat16), w_so_ref[...],
                preferred_element_type=jnp.float32)
    x = _layernorm(x, ln_w_e[1:2], ln_b_e[1:2])
    ds = residual + x

    # ---------------- cross attention ----------------
    residual = ds
    x = _layernorm(ds, ln_w_e[2:3], ln_b_e[2:3])
    ckv = ckv_ref[...]                                             # [B, T, 2E] bf16
    ck = ckv[:, :, 0:E]
    cv = ckv[:, :, E:2 * E]
    cq = jnp.dot(x.astype(jnp.bfloat16), w_cq_ref[...],
                 preferred_element_type=jnp.float32)
    attn = _mh_attention_1q(cq, ck, cv, cbias_ref[...], head_eh, head_he,
                            head_count)
    x = jnp.dot(attn.astype(jnp.bfloat16), w_co_ref[...],
                preferred_element_type=jnp.float32)
    x = _layernorm(x, ln_w_e[3:4], ln_b_e[3:4])
    ds = residual + x

    # ---------------- GLU ----------------
    residual = ds
    z = _layernorm(ds, ln_w_e[4:5], ln_b_e[4:5])
    zz = jnp.dot(z.astype(jnp.bfloat16), w_g01_ref[...],
                 preferred_element_type=jnp.float32)               # [B, 2G]
    h = _gelu(zz[:, 0:G]) * zz[:, G:2 * G]
    h = _layernorm(h, ln_w_g_ref[...], ln_b_g_ref[...])
    z = jnp.dot(h.astype(jnp.bfloat16), w_g2_ref[...],
                preferred_element_type=jnp.float32)
    ds_state[...] = residual + z

    @pl.when(l == nl - 1)
    def _finalize():
        ds_out_ref[...] = ds_state[...]

    cp_out.wait()


def lm_head_kernel(ds_ref, ln_w_ref, ln_b_ref, w_ref, probs_ref, top_ref,
                   xm_scratch, *, condition_factor, topk, tile_v):
    """Fused final-LN + conditioned-mix + lm_head + top-8 + probs.

    The (1, V) probs output block has a constant index_map, so it stays
    resident in VMEM: logits tiles are written into it, and the final grid
    step computes top-8 and rewrites it with the probabilities in place.
    """
    j = pl.program_id(0)

    @pl.when(j == 0)
    def _init():
        x = _layernorm(ds_ref[...], ln_w_ref[...], ln_b_ref[...])   # [B, E]
        a = condition_factor
        # matmul is linear -> mix the conditioned rows BEFORE the lm_head matmul
        xm_scratch[...] = (1.0 - a) * x[0:1, :] + a * x[1:2, :]     # [1, E]

    logits_tile = jnp.dot(xm_scratch[...].astype(jnp.bfloat16), w_ref[...],
                          preferred_element_type=jnp.float32)       # [1, TILE_V]
    off = pl.multiple_of(j * tile_v, tile_v)
    probs_ref[:, pl.ds(off, tile_v)] = logits_tile

    @pl.when(j == pl.num_programs(0) - 1)
    def _finalize():
        logits = probs_ref[...]                                     # [1, V]
        tops = _topk_lastdim(logits, topk)                          # [1, topk]
        top_ref[...] = tops
        top1 = tops[:, 0:1]
        thr = tops[:, topk - 1:topk]
        probs_ref[...] = jnp.where(logits < thr, 0.0, jnp.exp(logits - top1))


# ---------------------------------------------------------------------------
# pallas_call wrappers
# ---------------------------------------------------------------------------
def _head_indicators(embed_count, head_count):
    """bf16 head-indicator matrices: eh[e,h] = 1 iff lane e belongs to head h."""
    C = embed_count // head_count
    lane_head = jnp.arange(embed_count, dtype=jnp.int32) // C
    heads = jnp.arange(head_count, dtype=jnp.int32)
    eh = (lane_head[:, None] == heads[None, :]).astype(jnp.bfloat16)  # [E, H]
    return eh, eh.T                                                    # [H, E]


def _cross_kv(encoder_state, w_cross_kv):
    B, T, E = encoder_state.shape
    L = w_cross_kv.shape[0]
    return pl.pallas_call(
        cross_kv_kernel,
        grid=(L,),
        in_specs=[pl.BlockSpec((B, T, E), lambda l: (0, 0, 0)),
                  pl.BlockSpec((None, E, 2 * E), lambda l: (l, 0, 0))],
        out_specs=pl.BlockSpec((None, B, T, 2 * E), lambda l: (l, 0, 0, 0)),
        out_shape=jax.ShapeDtypeStruct((L, B, T, 2 * E), jnp.bfloat16),
        compiler_params=pltpu.CompilerParams(
            dimension_semantics=("parallel",)),
    )(encoder_state, w_cross_kv)


def precompute_cross_kv(params, encoder_state):
    """Cross-attention K/V depend only on encoder_state: compute once per image."""
    return _cross_kv(encoder_state, params['w_cross_kv'])


def _decoder_stack(token_index, ds_in, cross_bias3, head_eh, head_he, cross_kv,
                   attention_state, params, head_count):
    B, E = ds_in.shape
    T = cross_bias3.shape[1]
    L, twoB, S, _ = attention_state.shape
    G = params['w_glu2'].shape[1]
    H = head_count

    inputs = [token_index, ds_in,
              params['ln_emb_w'], params['ln_emb_b'],
              cross_bias3, head_eh, head_he, cross_kv,
              params['w_qkv'], params['w_self_out'], params['w_cross_q'],
              params['w_cross_out'], params['w_glu01'], params['w_glu2'],
              params['ln_w_e'], params['ln_b_e'],
              params['ln_w_g'], params['ln_b_g'],
              attention_state]
    in_specs = [
        _SMEM_SPEC(),                                               # token_index
        pl.BlockSpec((B, E), lambda l: (0, 0)),                     # ds_in
        pl.BlockSpec((1, E), lambda l: (0, 0)),                     # ln_emb_w
        pl.BlockSpec((1, E), lambda l: (0, 0)),                     # ln_emb_b
        pl.BlockSpec((B, T, 1), lambda l: (0, 0, 0)),               # cross bias
        pl.BlockSpec((E, H), lambda l: (0, 0)),                     # head_eh
        pl.BlockSpec((H, E), lambda l: (0, 0)),                     # head_he
        pl.BlockSpec((None, B, T, 2 * E), lambda l: (l, 0, 0, 0)),  # cross K|V
        pl.BlockSpec((None, E, 3 * E), lambda l: (l, 0, 0)),        # w_qkv
        pl.BlockSpec((None, E, E), lambda l: (l, 0, 0)),            # w_self_out
        pl.BlockSpec((None, E, E), lambda l: (l, 0, 0)),            # w_cross_q
        pl.BlockSpec((None, E, E), lambda l: (l, 0, 0)),            # w_cross_out
        pl.BlockSpec((None, E, 2 * G), lambda l: (l, 0, 0)),        # w_glu01
        pl.BlockSpec((None, G, E), lambda l: (l, 0, 0)),            # w_glu2
        pl.BlockSpec((None, 5, E), lambda l: (l, 0, 0)),            # ln_w_e
        pl.BlockSpec((None, 5, E), lambda l: (l, 0, 0)),            # ln_b_e
        pl.BlockSpec((None, 1, G), lambda l: (l, 0, 0)),            # ln_w_g
        pl.BlockSpec((None, 1, G), lambda l: (l, 0, 0)),            # ln_b_g
        _ANY_SPEC(),                                                # KV cache
    ]
    out_specs = (pl.BlockSpec((B, E), lambda l: (0, 0)),
                 _ANY_SPEC())
    out_shape = (jax.ShapeDtypeStruct((B, E), jnp.float32),
                 jax.ShapeDtypeStruct(attention_state.shape,
                                      attention_state.dtype))
    scratch_shapes = [
        pltpu.VMEM((B, E), jnp.float32),              # running decoder state
        pltpu.VMEM((2, twoB, S, E), jnp.bfloat16),    # double-buffered cache slabs
        pltpu.VMEM((twoB, 1, E), jnp.bfloat16),       # new (k, v) column
        pltpu.SemaphoreType.DMA((3,)),                # 2 slab-in sems + 1 col-out sem
    ]
    # TODO(synk): at production sizes tile w_glu01/w_qkv (or pl.Buffered(1)) and
    # use int8/fp8 weights so the double-buffered weight stream fits v7x VMEM.
    return pl.pallas_call(
        functools.partial(decoder_stack_kernel, head_count=head_count),
        grid=(L,),
        in_specs=in_specs,
        out_specs=out_specs,
        out_shape=out_shape,
        scratch_shapes=scratch_shapes,
        input_output_aliases={len(inputs) - 1: 1},  # attention_state -> out[1]
        compiler_params=pltpu.CompilerParams(
            dimension_semantics=("arbitrary",),
            vmem_limit_bytes=64 * 1024 * 1024),
    )(*inputs)


def _lm_head(ds, ln_w, ln_b, lm_head_bf16, condition_factor):
    B, E = ds.shape
    V = lm_head_bf16.shape[1]
    tile_v = V if V <= 2048 else 2048
    assert V % tile_v == 0
    num_tiles = V // tile_v
    return pl.pallas_call(
        functools.partial(lm_head_kernel,
                          condition_factor=condition_factor,
                          topk=TOPK, tile_v=tile_v),
        grid=(num_tiles,),
        in_specs=[pl.BlockSpec((B, E), lambda j: (0, 0)),
                  pl.BlockSpec((1, E), lambda j: (0, 0)),
                  pl.BlockSpec((1, E), lambda j: (0, 0)),
                  pl.BlockSpec((E, tile_v), lambda j: (0, j))],
        out_specs=(pl.BlockSpec((1, V), lambda j: (0, 0)),
                   pl.BlockSpec((1, TOPK), lambda j: (0, 0))),
        out_shape=(jax.ShapeDtypeStruct((1, V), jnp.float32),
                   jax.ShapeDtypeStruct((1, TOPK), jnp.float32)),
        scratch_shapes=[pltpu.VMEM((1, E), jnp.float32)],
        compiler_params=pltpu.CompilerParams(
            dimension_semantics=("arbitrary",)),
    )(ds, ln_w, ln_b, lm_head_bf16)


# ---------------------------------------------------------------------------
# parameters (deterministic synthetic init; Linear weights stored as [in, out])
# ---------------------------------------------------------------------------
def make_params(key, cfg):
    E = cfg['embed_count']
    G = cfg['glu_embed_count']
    V = cfg['image_vocab_size'] + 1
    S = cfg['image_token_count']
    L = cfg['layer_count']

    def w(k, shape, dtype=jnp.bfloat16):
        return (0.02 * jax.random.normal(k, shape, dtype=jnp.float32)).astype(dtype)

    keys = jax.random.split(key, 10)
    params = {
        'embed_tokens': w(keys[0], (V, E), jnp.float32),
        'embed_positions': w(keys[1], (S, E), jnp.float32),
        'lm_head': w(keys[2], (E, V)),                       # bf16
        'ln_emb_w': jnp.ones((1, E), jnp.float32),
        'ln_emb_b': jnp.zeros((1, E), jnp.float32),
        'final_ln_w': jnp.ones((1, E), jnp.float32),
        'final_ln_b': jnp.zeros((1, E), jnp.float32),
        # per-layer stacked, fused weights (bf16)
        'w_qkv': w(keys[3], (L, E, 3 * E)),                  # [k | v | q]
        'w_self_out': w(keys[4], (L, E, E)),
        'w_cross_kv': w(keys[5], (L, E, 2 * E)),             # [k | v]
        'w_cross_q': w(keys[6], (L, E, E)),
        'w_cross_out': w(keys[7], (L, E, E)),
        'w_glu01': w(keys[8], (L, E, 2 * G)),                # [fc0 | fc1]
        'w_glu2': w(keys[9], (L, G, E)),
        # stacked LayerNorm params (rows: pre_self, self, pre_enc, enc, glu0)
        'ln_w_e': jnp.ones((L, 5, E), jnp.float32),
        'ln_b_e': jnp.zeros((L, 5, E), jnp.float32),
        'ln_w_g': jnp.ones((L, 1, G), jnp.float32),
        'ln_b_g': jnp.zeros((L, 1, G), jnp.float32),
    }
    return params


# ---------------------------------------------------------------------------
# forward (mirrors DalleBartDecoderBlockTorch.forward)
# ---------------------------------------------------------------------------
def dalle_bart_decoder_block_forward(params, cfg, text_tokens, encoder_state,
                                     attention_state, prev_token, token_index,
                                     cross_kv=None):
    B = encoder_state.shape[0]
    E = cfg['embed_count']
    H = cfg['attention_head_count']
    a = cfg['condition_factor']

    # cross-attention K/V depend only on encoder_state: hoisted out of the
    # per-token path (pass it in precomputed from the sampling loop)
    if cross_kv is None:
        cross_kv = precompute_cross_kv(params, encoder_state)

    # additive cross-attention bias, pre-shaped [B, T, 1] (T on sublanes)
    cross_bias3 = jnp.where(text_tokens == 1, NEG, 0.0).astype(
        jnp.float32)[:, :, None]

    prev_b = jnp.broadcast_to(prev_token, (B,))
    idx_b = jnp.broadcast_to(token_index, (B,))
    tok_emb = jnp.take(params['embed_tokens'], prev_b, axis=0)       # [B, E]
    pos_emb = jnp.take(params['embed_positions'], idx_b, axis=0)     # [B, E]
    ds_in = tok_emb + pos_emb          # embedding LN folded into the layer stack

    head_eh, head_he = _head_indicators(E, H)

    ds, new_attention_state = _decoder_stack(
        token_index.astype(jnp.int32), ds_in, cross_bias3, head_eh, head_he,
        cross_kv, attention_state, params, H)

    probs, top_logits = _lm_head(ds, params['final_ln_w'],
                                 params['final_ln_b'], params['lm_head'], a)
    return probs[0], new_attention_state, top_logits[0]


# ---------------------------------------------------------------------------
# main
# ---------------------------------------------------------------------------
if __name__ == "__main__":
    cfg = dict(
        image_vocab_size=127,       # vocab = 128
        image_token_count=16,
        sample_token_count=16,
        embed_count=32,
        attention_head_count=2,
        glu_embed_count=64,
        layer_count=2,
        batch_count=2,
        start_token=127,
        condition_factor=10.0,
    )
    B = cfg['batch_count']
    T = 8
    E = cfg['embed_count']
    S = cfg['image_token_count']
    L = cfg['layer_count']

    key = jax.random.PRNGKey(0)
    kp, k1, k2, k3 = jax.random.split(key, 4)
    params = make_params(kp, cfg)

    text_tokens = jax.random.randint(k1, (B, T), 0, 6, dtype=jnp.int32)  # some == 1
    encoder_state = jax.random.normal(k2, (B, T, E), dtype=jnp.float32)
    # KV cache is kept in bf16 end-to-end (halves cache DMA bytes)
    attention_state = jax.random.normal(
        k3, (L, 2 * B, S, E), dtype=jnp.float32).astype(jnp.bfloat16)
    prev_token = jnp.array([cfg['start_token']], dtype=jnp.int32)
    token_index = jnp.array([3], dtype=jnp.int32)

    # computed once per image, reused for every generated token
    cross_kv = precompute_cross_kv(params, encoder_state)

    probs, new_attention_state, top_logits = dalle_bart_decoder_block_forward(
        params, cfg, text_tokens, encoder_state, attention_state,
        prev_token, token_index, cross_kv=cross_kv)
    jax.block_until_ready((probs, new_attention_state, top_logits))

    assert probs.shape == (cfg['image_vocab_size'] + 1,)
    assert new_attention_state.shape == (L, 2 * B, S, E)
    assert top_logits.shape == (TOPK,)
    assert bool(jnp.all(jnp.isfinite(probs)))
    assert bool(jnp.all(jnp.isfinite(new_attention_state.astype(jnp.float32))))
    print("KERNEL_OK")
</pallas_src>

<mosaic_0001>
module attributes {stable_mosaic.version = 11 : i64} {
  func.func @cross_kv_kernel(%arg0: i32, %arg1: memref<2x8x32xf32, #tpu.memory_space<vmem>>, %arg2: memref<1x32x64xbf16, #tpu.memory_space<vmem>>, %arg3: memref<1x2x8x64xbf16, #tpu.memory_space<vmem>>) attributes {dimension_semantics = [#tpu.dimension_semantics<parallel>], iteration_bounds = array<i64: 2>, scalar_prefetch = 0 : i64, scratch_operands = 0 : i64, tpu.core_type = #tpu.core_type<tc>, window_params = [{pipeline_mode = #tpu.pipeline_mode<synchronous>, transform_indices = @transform_0, window_bounds = array<i64: 2, 8, 32>}, {transform_indices = @transform_1, window_bounds = array<i64: 1, 32, 64>}, {transform_indices = @transform_2, window_bounds = array<i64: 1, 2, 8, 64>}]} {
    %c0 = arith.constant 0 : index
    %c0_0 = arith.constant 0 : index
    %c0_1 = arith.constant 0 : index
    %0 = vector.load %arg1[%c0, %c0_0, %c0_1] : memref<2x8x32xf32, #tpu.memory_space<vmem>>, vector<2x8x32xf32>
    %1 = vector.shape_cast %0 : vector<2x8x32xf32> to vector<16x32xf32>
    %2 = arith.truncf %1 : vector<16x32xf32> to vector<16x32xbf16>
    %c0_2 = arith.constant 0 : index
    %c0_3 = arith.constant 0 : index
    %c0_4 = arith.constant 0 : index
    %3 = vector.load %arg2[%c0_2, %c0_3, %c0_4] : memref<1x32x64xbf16, #tpu.memory_space<vmem>>, vector<1x32x64xbf16>
    %4 = vector.shape_cast %3 : vector<1x32x64xbf16> to vector<32x64xbf16>
    %cst = arith.constant dense<0.000000e+00> : vector<16x64xf32>
    %5 = tpu.matmul %2, %4, %cst {dimension_numbers = #tpu.dot_dimension_numbers<[1], [0], [0], [1], [0, 0, 1, 1], [], []>} : vector<16x32xbf16>, vector<32x64xbf16>, vector<16x64xf32> -> vector<16x64xf32>
    %6 = vector.shape_cast %5 : vector<16x64xf32> to vector<2x8x64xf32>
    %7 = arith.truncf %6 : vector<2x8x64xf32> to vector<2x8x64xbf16>
    %c0_5 = arith.constant 0 : index
    %c0_6 = arith.constant 0 : index
    %c0_7 = arith.constant 0 : index
    %c0_8 = arith.constant 0 : index
    %8 = vector.load %arg3[%c0_5, %c0_6, %c0_7, %c0_8] : memref<1x2x8x64xbf16, #tpu.memory_space<vmem>>, vector<1x2x8x64xbf16>
    %9 = vector.shape_cast %8 : vector<1x2x8x64xbf16> to vector<2x8x64xbf16>
    %10 = vector.shape_cast %7 : vector<2x8x64xbf16> to vector<1x2x8x64xbf16>
    tpu.vector_store %arg3[%c0_5, %c0_6, %c0_7, %c0_8], %10 {strides = array<i32>} : memref<1x2x8x64xbf16, #tpu.memory_space<vmem>>, vector<1x2x8x64xbf16>,
    return
  }
  func.func @transform_0(%arg0: i32) -> (i32, i32, i32) {
    %c0_i32 = arith.constant 0 : i32
    %c0_i32_0 = arith.constant 0 : i32
    %c0_i32_1 = arith.constant 0 : i32
    %c0_i32_2 = arith.constant 0 : i32
    return %c0_i32, %c0_i32_0, %c0_i32_1 : i32, i32, i32
  }
  func.func @transform_1(%arg0: i32) -> (i32, i32, i32) {
    %c0_i32 = arith.constant 0 : i32
    %c0_i32_0 = arith.constant 0 : i32
    %c0_i32_1 = arith.constant 0 : i32
    return %arg0, %c0_i32, %c0_i32_0 : i32, i32, i32
  }
  func.func @transform_2(%arg0: i32) -> (i32, i32, i32, i32) {
    %c0_i32 = arith.constant 0 : i32
    %c0_i32_0 = arith.constant 0 : i32
    %c0_i32_1 = arith.constant 0 : i32
    %c0_i32_2 = arith.constant 0 : i32
    return %arg0, %c0_i32, %c0_i32_0, %c0_i32_1 : i32, i32, i32, i32
  }
}

</mosaic_0001>

<llo_original>
// kernel: tpu_custom_call.1
$region0: #{tpu_custom_call.1}
  #allocation0 [shape = 'u32[]', space=smem, size = 0x4, offset = 0x4, fixed_abs, tag = 'smem constant byte address 0x4 - core index']
  #allocation1 [shape = 'u32[144,128]{1,0:T(1,128)}', space=vmem, size = 0x12000, scoped, tag = 'internal scratch']
  %s0 = inlined_call_operand.hbm [shape: f32[2,8,32], index: 0, kind: input, shape index: {}]
  %s1 = inlined_call_operand.hbm [shape: bf16[2,32,64], index: 1, kind: input, shape index: {}]
  %s2 = inlined_call_operand.hbm [shape: bf16[2,2,8,64], index: 2, kind: output, shape index: {}]
  %s3 = sld [smem:[#allocation0]]
  $region49: #{tpu_custom_call.1} parent=0
    _
  %s5 = ssub.s32 1, %s3
  %s6 = scalar_select 0, %s5, %s3
  $region1: #{tpu_custom_call.1} parent=0
    #allocation2 [shape = 'u8[8192]{0}', space=vmem, size = 0x2000, scoped, tag = 'input window, operand 0, single buffered']
    #allocation3 [shape = 's32[2]{0}', space=sflag, size = 0x8, scoped, tag = 'scoped memory for tpu_custom_call.1']
    #allocation4 [shape = 's32[2]{0}', space=sflag, size = 0x8, scoped, tag = 'scoped memory for tpu_custom_call.1']
    #allocation5 [shape = 'u8[16384]{0}', space=vmem, size = 0x4000, scoped, tag = 'input window, operand 1']
    #allocation6 [shape = 's32[2]{0}', space=sflag, size = 0x8, scoped, tag = 'scoped memory for tpu_custom_call.1']
    #allocation7 [shape = 'u8[8192]{0}', space=vmem, size = 0x2000, scoped, tag = 'output window, operand 0']
    %7 = vsyncpa [#allocation3], 0
    %8 = vsyncpa [#allocation6], 0
    %s9 = scalar_lea.sflag [#allocation6], 1
    %10 = vsyncpa %s9, 0
    %11 = vsyncpa [#allocation4], 0
    %s12 = scalar_lea.sflag [#allocation4], 1
    %13 = vsyncpa %s12, 0
    loop: start=0, step=1, limit=4
    $region2: #{tpu_custom_call.1} parent=1 // loop_pre_header
      _
    $region3: #{tpu_custom_call.1} parent=1 // loop_header
      %s15 = sphi 0, %s19
      %p16 = scmp.ge.s32.totalorder %s15, 4
      %s23 = sphi 0, %s23
      %s25 = sphi 0, %s23
      %s26 = sphi 0, %s25
      %s40 = sphi 0, %s26
      %s46 = sphi 0, %s48
      %s49 = sphi 0, %s46
      %s50 = sphi 0, %s49
      %s66 = sphi 0, %s50
      %s72 = sphi 0, %s74
      %s75 = sphi 0, %s72
      %s76 = sphi 0, %s75
      %s92 = sphi 0, %s76
    $region4: #{tpu_custom_call.1} parent=1 // loop_header_branch
      %18 = sbr.rel (%p16) target = $region8
    $region5: #{tpu_custom_call.1} parent=1 // loop_body
      %s20 = ssub.s32 %s15, 1
      %s21 = ssub.s32 %s15, 2
      %s22 = sadd.s32 %s15, 1
      %s24 = sadd.s32 %s23, 1
      %p27 = scmp.eq.s32.totalorder %s15, 1
      %p28 = scmp.ne.s32.totalorder %s23, %s25
      %p29 = scmp.eq.s32.totalorder %s15, 0
      %p30 = por %p28, %p29
      %p31 = scmp.ne.s32.totalorder %s23, %s25
      %p32 = scmp.eq.s32.totalorder %s20, 1
      %p33 = por %p31, %p32
      %p34 = scmp.ne.s32.totalorder %s25, %s26
      %p35 = scmp.eq.s32.totalorder %s20, 0
      %p36 = por %p34, %p35
      %p37 = scmp.ne.s32.totalorder %s25, %s26
      %p38 = scmp.eq.s32.totalorder %s21, 1
      %p39 = por %p37, %p38
      %p41 = scmp.ne.s32.totalorder %s26, %s40
      %p42 = scmp.eq.s32.totalorder %s21, 0
      %p43 = por %p41, %p42
      %s44 = ssub.s32 %s15, %s22
      %p45 = scmp.eq.s32.totalorder %s44, 0
      %s47 = sadd.s32 %s46, 1
      %s48 = scalar_select %p45, %s46, %s47
      %p51 = pneg %p45
      %p52 = scmp.eq.s32.totalorder %s15, 1
      %p53 = por %p51, %p52
      %p54 = scmp.ne.s32.totalorder %s46, %s49
      %p55 = scmp.eq.s32.totalorder %s15, 0
      %p56 = por %p54, %p55
      %p57 = scmp.ne.s32.totalorder %s46, %s49
      %p58 = scmp.eq.s32.totalorder %s20, 1
      %p59 = por %p57, %p58
      %p60 = scmp.ne.s32.totalorder %s49, %s50
      %p61 = scmp.eq.s32.totalorder %s20, 0
      %p62 = por %p60, %p61
      %p63 = scmp.ne.s32.totalorder %s49, %s50
      %p64 = scmp.eq.s32.totalorder %s21, 1
      %p65 = por %p63, %p64
      %p67 = scmp.ne.s32.totalorder %s50, %s66
      %p68 = scmp.eq.s32.totalorder %s21, 0
      %p69 = por %p67, %p68
      %s70 = ssub.s32 %s15, %s22
      %p71 = scmp.eq.s32.totalorder %s70, 0
      %s73 = sadd.s32 %s72, 1
      %s74 = scalar_select %p71, %s72, %s73
      %p77 = pneg %p71
      %p78 = scmp.eq.s32.totalorder %s15, 1
      %p79 = por %p77, %p78
      %p80 = scmp.ne.s32.totalorder %s72, %s75
      %p81 = scmp.eq.s32.totalorder %s15, 0
      %p82 = por %p80, %p81
      %p83 = scmp.ne.s32.totalorder %s72, %s75
      %p84 = scmp.eq.s32.totalorder %s20, 1
      %p85 = por %p83, %p84
      %p86 = scmp.ne.s32.totalorder %s75, %s76
      %p87 = scmp.eq.s32.totalorder %s20, 0
      %p88 = por %p86, %p87
      %p89 = scmp.ne.s32.totalorder %s75, %s76
      %p90 = scmp.eq.s32.totalorder %s21, 1
      %p91 = por %p89, %p90
      %p93 = scmp.ne.s32.totalorder %s76, %s92
      %p94 = scmp.eq.s32.totalorder %s21, 0
      %p95 = por %p93, %p94
      %p96 = scmp.le.s32.totalorder 1, %s15
      %p97 = scmp.lt.s32.totalorder %s15, 3
      %p98 = pnand %p96, %p97
      %p99 = pneg %p98
      // Predicated region
      $region9: #{tpu_custom_call.1} parent=5 // pred_check
        _
      $region10: #{tpu_custom_call.1} parent=5 // pred_check_branch
        %101 = sbr.rel (%p98) target = $region12
      $region11: #{tpu_custom_call.1} parent=5 // pred_region
        %s102 = ssub.s32 %s15, 1
        // Predicated region
        $region13: #{tpu_custom_call.1} parent=11 // pred_check
          %p103 = pneg %p36
        $region14: #{tpu_custom_call.1} parent=11 // pred_check_branch
          %105 = sbr.rel (%p103) target = $region16
        $region15: #{tpu_custom_call.1} parent=11 // pred_region
          %s107 = ssub.s32 256, 256
          %108 = vsyncadd [#allocation3], %s107
          %s109 = sshll.u32 [#allocation2], 4
          %s110 = int_to_ptr.vmem [resolvable:$true] %s109
          %115 = dma.hbm_to_vmem [thread:$0]  %s0, 256, %s110, [#allocation3], 128, 128, 8
        $region16: #{tpu_custom_call.1} parent=11 // pred_fallthru
          _
      $region12: #{tpu_custom_call.1} parent=5 // pred_fallthru
        _
      %p116 = scmp.lt.s32.totalorder %s15, 2
      // Predicated region
      $region17: #{tpu_custom_call.1} parent=5 // pred_check
        %p117 = pneg %p116
      $region18: #{tpu_custom_call.1} parent=5 // pred_check_branch
        %119 = sbr.rel (%p117) target = $region20
      $region19: #{tpu_custom_call.1} parent=5 // pred_region
        // Predicated region
        $region21: #{tpu_custom_call.1} parent=19 // pred_check
          %p120 = pneg %p56
        $region22: #{tpu_custom_call.1} parent=19 // pred_check_branch
          %122 = sbr.rel (%p120) target = $region24
        $region23: #{tpu_custom_call.1} parent=19 // pred_region
          %s123 = sand.u32 %s46, 1
          %s124 = scalar_lea.sflag [#allocation6], %s123
          %s125 = sand.u32 %s46, 1
          %s126 = smul.addr %s125, 16
          %s127 = scalar_lea.vmem [#allocation5], %s126
          %s129 = ssub.s32 256, 256
          %130 = vsyncadd %s124, %s129
          %s131 = smul.addr %s15, 4
          %s132 = smul.addr %s131, 64
          %s133 = scalar_lea.hbm %s1, %s132
          %s134 = sshll.u32 %s127, 4
          %s135 = int_to_ptr.vmem [resolvable:$true] %s134
          %140 = dma.hbm_to_vmem [thread:$0]  %s133, 256, %s135, %s124, 64, 64, 4
        $region24: #{tpu_custom_call.1} parent=19 // pred_fallthru
          _
      $region20: #{tpu_custom_call.1} parent=5 // pred_fallthru
        _
      %p141 = scmp.le.s32.totalorder 1, %s15
      %p142 = scmp.lt.s32.totalorder %s15, 3
      %p143 = pnand %p141, %p142
      %p144 = pneg %p143
      // Predicated region
      $region25: #{tpu_custom_call.1} parent=5 // pred_check
        _
      $region26: #{tpu_custom_call.1} parent=5 // pred_check_branch
        %146 = sbr.rel (%p143) target = $region28
      $region27: #{tpu_custom_call.1} parent=5 // pred_region
        %s147 = ssub.s32 %s15, 1
        // Predicated region
        $region29: #{tpu_custom_call.1} parent=27 // pred_check
          %p148 = pneg %p36
        $region30: #{tpu_custom_call.1} parent=27 // pred_check_branch
          %150 = sbr.rel (%p148) target = $region32
        $region31: #{tpu_custom_call.1} parent=27 // pred_region
          %151 = dma.done [#allocation3], 256
        $region32: #{tpu_custom_call.1} parent=27 // pred_fallthru
          _
        %s152 = sand.u32 %s49, 1
        %s153 = scalar_lea.sflag [#allocation6], %s152
        %s154 = sand.u32 %s49, 1
        %s155 = smul.addr %s154, 16
        %s156 = scalar_lea.vmem [#allocation5], %s155
        // Predicated region
        $region33: #{tpu_custom_call.1} parent=27 // pred_check
          %p157 = pneg %p62
        $region34: #{tpu_custom_call.1} parent=27 // pred_check_branch
          %159 = sbr.rel (%p157) target = $region36
        $region35: #{tpu_custom_call.1} parent=27 // pred_region
          %160 = dma.done %s153, 256
        $region36: #{tpu_custom_call.1} parent=27 // pred_fallthru
          _
        %p161 = pneg %p36
        %p162 = pneg %p33
        %s163 = sand.u32 %s49, 1
        %s164 = scalar_lea.sflag [#allocation6], %s163
        %s165 = sand.u32 %s49, 1
        %s166 = smul.addr %s165, 16
        %s167 = scalar_lea.vmem [#allocation5], %s166
        %p168 = pneg %p62
        %p169 = pneg %p59
        %p170 = pneg %p88
        %p171 = pneg %p85
        %s172 = sand.u32 %s75, 1
        %s173 = scalar_lea.sflag [#allocation4], %s172
        %s174 = sand.u32 %s75, 1
        %s175 = smul.addr %s174, 8
        %s176 = scalar_lea.vmem [#allocation7], %s175
        %v178 = vld [vmem:[#allocation2] sm:$0xff]
        %v179 = vld [vmem:[#allocation2 + $0x8] sm:$0xff]
        %v180 = vpack.c.bf16 %v179, %v178
        %v181 = vld [vmem:[%s156] sm:$0xf]
        %v182 = vld [vmem:[%s156 + $0x4] sm:$0xf]
        %v183 = vld [vmem:[%s156 + $0x8] sm:$0xf]
        %v184 = vld [vmem:[%s156 + $0xc] sm:$0xf]
        %v189 = vunpack.c.l.b16 %v181
        %v190 = vunpack.c.l.b16 %v182
        %v191 = vunpack.c.l.b16 %v183
        %v192 = vunpack.c.l.b16 %v184
        %v193 = vpack.c.b16 %v190, %v189
        %v194 = vpack.c.b16 %v192, %v191
        %vm197 = vcmask 261120
        %v199 = vsel %vm197, %v180, 0
        %201 = vmatprep.subr.bf16.mxu0 0
        %202 = vmatpush1.bf16.msra.mxu0 0
        %203 = vmatprep.subr.bf16.mxu0 0
        %204 = vmatpush1.bf16.msra.mxu0 0
        %205 = vmatprep.subr.bf16.mxu0 0
        %206 = vmatpush1.bf16.msra.mxu0 0
        %207 = vmatprep.subr.bf16.mxu0 0
        %208 = vmatpush1.bf16.msra.mxu0 0
        %209 = vmatprep.subr.bf16.mxu0 0
        %210 = vmatpush1.bf16.msra.mxu0 0
        %211 = vmatprep.subr.bf16.mxu0 0
        %212 = vmatpush1.bf16.msra.mxu0 0
        %213 = vmatprep.subr.bf16.mxu0 0
        %214 = vmatpush1.bf16.msra.mxu0 %v194
        %215 = vmatprep.subr.bf16.mxu0 0
        %216 = vmatpush1.bf16.msra.mxu0 %v193
        %217 = vmatprep.subr.bf16.mxu0 0
        %218 = vmatpush2.bf16.msra.mxu0 0
        %219 = vmatprep.subr.bf16.mxu0 0
        %220 = vmatpush2.bf16.msra.mxu0 0
        %221 = vmatprep.subr.bf16.mxu0 0
        %222 = vmatpush2.bf16.msra.mxu0 0
        %223 = vmatprep.subr.bf16.mxu0 0
        %224 = vmatpush2.bf16.msra.mxu0 0
        %225 = vmatprep.subr.bf16.mxu0 0
        %226 = vmatpush2.bf16.msra.mxu0 0
        %227 = vmatprep.subr.bf16.mxu0 0
        %228 = vmatpush2.bf16.msra.mxu0 0
        %229 = vmatprep.subr.bf16.mxu0 0
        %230 = vmatpush2.bf16.msra.mxu0 0
        %231 = vmatprep.subr.bf16.mxu0 0
        %232 = vmatpush2.bf16.msra.mxu0 0
        %233 = vmatprep.mubr.bf16.mxu0 0
        %234 = vmatmul.mubr.bf16.gmra.mxu0 %v199
        %v235 = vpop.f32.mrf.mxu0
        %v236 = vadd.f32 0.0, %v235
        %v237 = vpop.f32.mrf.mxu0
        %v238 = vpop.f32.mrf.mxu0
        %v239 = vadd.f32 0.0, %v238
        %v240 = vpop.f32.mrf.mxu0
        %241 = vdwg.mxu0
        %v242 = vpack.c.bf16 %v236, %v236
        %v243 = vpack.c.bf16 %v239, %v239
        %vm244 = vcmask 519168
        %245 = vst.msk [vmem:[%s176] sm:$0xf] %vm244, %v242
        %246 = vst.msk [vmem:[%s176 + $0x4] sm:$0xf] %vm244, %v243
        %s247 = sand.u32 %s75, 1
        %s248 = scalar_lea.sflag [#allocation4], %s247
        %s249 = sand.u32 %s75, 1
        %s250 = smul.addr %s249, 8
        %s251 = scalar_lea.vmem [#allocation7], %s250
        // Predicated region
        $region37: #{tpu_custom_call.1} parent=27 // pred_check
          %p252 = pneg %p85
        $region38: #{tpu_custom_call.1} parent=27 // pred_check_branch
          %254 = sbr.rel (%p252) target = $region40
        $region39: #{tpu_custom_call.1} parent=27 // pred_region
          %s256 = ssub.s32 128, 128
          %257 = vsyncadd %s248, %s256
          %s258 = smul.addr %s20, 2
          %s259 = smul.addr %s258, 64
          %s260 = scalar_lea.hbm %s2, %s259
          %s261 = sshll.u32 %s251, 4
          %s262 = int_to_ptr.vmem [resolvable:$true] %s261
          %267 = dma.vmem_to_hbm [thread:$0]  %s262, 128, %s260, %s248, 64, 64, 4
        $region40: #{tpu_custom_call.1} parent=27 // pred_fallthru
          _
      $region28: #{tpu_custom_call.1} parent=5 // pred_fallthru
        _
      %p268 = scmp.le.s32.totalorder 2, %s15
      // Predicated region
      $region41: #{tpu_custom_call.1} parent=5 // pred_check
        %p269 = pneg %p268
      $region42: #{tpu_custom_call.1} parent=5 // pred_check_branch
        %271 = sbr.rel (%p269) target = $region44
      $region43: #{tpu_custom_call.1} parent=5 // pred_region
        %s272 = ssub.s32 %s15, 2
        // Predicated region
        $region45: #{tpu_custom_call.1} parent=43 // pred_check
          %p273 = pneg %p91
        $region46: #{tpu_custom_call.1} parent=43 // pred_check_branch
          %275 = sbr.rel (%p273) target = $region48
        $region47: #{tpu_custom_call.1} parent=43 // pred_region
          %s276 = sand.u32 %s76, 1
          %s277 = scalar_lea.sflag [#allocation4], %s276
          %s278 = sand.u32 %s76, 1
          %s279 = smul.addr %s278, 8
          %s280 = scalar_lea.vmem [#allocation7], %s279
          %281 = dma.done %s277, 128
        $region48: #{tpu_custom_call.1} parent=43 // pred_fallthru
          _
      $region44: #{tpu_custom_call.1} parent=5 // pred_fallthru
        _
    $region6: #{tpu_custom_call.1} parent=1 // loop_footer
      %s19 = sadd.s32 1, %s15
    $region7: #{tpu_custom_call.1} parent=1 // loop_footer_branch
      %14 = sbr.rel target = $region3
    $region8: #{tpu_custom_call.1} parent=1 // loop_exit
      _
    %282 = vsyncpa [#allocation3], 1
    %s283 = scalar_lea.sflag [#allocation3], 1
    %284 = vsyncpa %s283, 1
    %285 = vsyncpa [#allocation6], 1
    %s286 = scalar_lea.sflag [#allocation6], 1
    %287 = vsyncpa %s286, 1
    %288 = vsyncpa [#allocation4], 1
    %s289 = scalar_lea.sflag [#allocation4], 1
    %290 = vsyncpa %s289, 1

</llo_original>
